<compile_context>
chip_gen: v7x
topology: tpu7x:2x2x1
jax: 0.10.0
libtpu: 0.0.40
codegen_flags: <defaults>
</compile_context>

<pallas_src>
import jax
import jax.numpy as jnp
from jax.experimental import pallas as pl
from jax.experimental.pallas import tpu as pltpu

LANE = 128


def decision_kernel(x_ref, w_ref, b_ref, logits_ref, probs_ref, act_ref):
    x = x_ref[...]                                   # (TB, F)
    w = w_ref[...]                                   # (F, S_pad), resident
    b = b_ref[...]                                   # (1, S_pad), resident

    # Hot path: policy linear layer on the MXU (f32 accumulation).
    logits = jnp.dot(x, w, preferred_element_type=jnp.float32) + b
    logits_ref[...] = logits                         # lane-dense store

    # Numerically-stable softmax; reciprocal goes to the (idle) EUP slot.
    m = jnp.max(logits, axis=-1, keepdims=True)
    e = jnp.exp(logits - m)
    denom = jnp.sum(e, axis=-1, keepdims=True)
    probs_ref[...] = e * pl.reciprocal(denom, approx=True)

    # Greedy action = first index achieving the row max (torch argmax semantics).
    ids = jax.lax.broadcasted_iota(jnp.int32, logits.shape, 1)
    big = jnp.iinfo(jnp.int32).max
    amax = jnp.min(jnp.where(logits == m, ids, big), axis=-1, keepdims=True)
    # Broadcast across lanes so the int32 store is also lane-dense.
    act_ref[...] = jnp.broadcast_to(amax, act_ref.shape)


def decision_forward(x, w_t, b):
    """x: (B, F) f32, w_t: (F, S) f32 (pre-transposed weight), b: (1, S) f32."""
    B, F = x.shape
    S = w_t.shape[1]
    S_pad = max(LANE, pl.cdiv(S, LANE) * LANE)

    # Pad policy weights/bias so the selection axis is a full lane multiple.
    # Padded columns get a huge negative bias -> exp() underflows to 0 and they
    # can never win the argmax.
    if S_pad != S:
        w_p = jnp.zeros((F, S_pad), w_t.dtype).at[:, :S].set(w_t)
        b_p = jnp.full((1, S_pad), -1e30, b.dtype).at[:, :S].set(b)
    else:
        w_p, b_p = w_t, b

    # Batch tile: as large as comfortably fits scoped VMEM (cap at 512 rows,
    # sized conservatively for v7x's 32 MiB default scoped VMEM).
    TB = B if B <= 512 else 512
    grid = (pl.cdiv(B, TB),)

    out_shape = (
        jax.ShapeDtypeStruct((B, S_pad), jnp.float32),  # padded logits
        jax.ShapeDtypeStruct((B, S_pad), jnp.float32),  # padded softmax probs
        jax.ShapeDtypeStruct((B, LANE), jnp.int32),     # actions (broadcast)
    )
    cost = pl.CostEstimate(
        flops=2 * B * F * S_pad,
        transcendentals=B * S_pad,
        bytes_accessed=4 * (B * F + F * S_pad + 2 * B * S_pad + B * LANE),
    )

    logits_p, probs_p, act_p = pl.pallas_call(
        decision_kernel,
        out_shape=out_shape,
        grid=grid,
        in_specs=[
            pl.BlockSpec((TB, F), lambda i: (i, 0)),       # x, batch-tiled
            pl.BlockSpec((F, S_pad), lambda i: (0, 0)),    # weight, resident
            pl.BlockSpec((1, S_pad), lambda i: (0, 0)),    # bias, resident
        ],
        out_specs=(
            pl.BlockSpec((TB, S_pad), lambda i: (i, 0)),
            pl.BlockSpec((TB, S_pad), lambda i: (i, 0)),
            pl.BlockSpec((TB, LANE), lambda i: (i, 0)),
        ),
        compiler_params=pltpu.CompilerParams(
            dimension_semantics=("parallel",)),
        cost_estimate=cost,
    )(x, w_p, b_p)

    logits = logits_p[:, :S]
    probs = probs_p[:, :S]
    actions = act_p[:, 0]          # module does actions.reshape(-1)
    # ys = inputs passed through unchanged: return x directly (zero copy).
    return x, actions, logits, probs


if __name__ == "__main__":
    # Small shapes implied by the module: batch=8, in_features=32,
    # num_selections=4, num_agents=1.
    B, F, S = 8, 32, 4

    key = jax.random.PRNGKey(0)
    kx, kw, kb = jax.random.split(key, 3)

    x = jax.random.normal(kx, (B, F), dtype=jnp.float32)
    # Deterministic Linear(in_features=F, out_features=S) init (Kaiming-uniform-ish).
    bound = 1.0 / jnp.sqrt(F)
    w = jax.random.uniform(kw, (S, F), minval=-bound, maxval=bound, dtype=jnp.float32)
    b = jax.random.uniform(kb, (1, S), minval=-bound, maxval=bound, dtype=jnp.float32)
    w_t = w.T  # (F, S) pre-transposed for the kernel

    ys, actions, logits, probs = decision_forward(x, w_t, b)
    jax.block_until_ready((ys, actions, logits, probs))

    # Reference check in plain JAX.
    ref_logits = x @ w.T + b
    ref_probs = jax.nn.softmax(ref_logits, axis=-1)
    ref_actions = jnp.argmax(ref_logits, axis=-1).astype(jnp.int32)

    assert logits.shape == (B, S) and probs.shape == (B, S) and actions.shape == (B,)
    assert jnp.allclose(logits, ref_logits, atol=1e-5, rtol=1e-5)
    # probs use the EUP approximate reciprocal -> slightly looser tolerance.
    assert jnp.allclose(probs, ref_probs, atol=2e-3)
    assert jnp.array_equal(actions, ref_actions)
    assert jnp.allclose(ys, x)

    print("KERNEL_OK")
</pallas_src>

<mosaic_0001>
module attributes {stable_mosaic.version = 11 : i64} {
  func.func @decision_kernel(%arg0: i32, %arg1: memref<8x32xf32, #tpu.memory_space<vmem>>, %arg2: memref<32x128xf32, #tpu.memory_space<vmem>>, %arg3: memref<1x128xf32, #tpu.memory_space<vmem>>, %arg4: memref<8x128xf32, #tpu.memory_space<vmem>>, %arg5: memref<8x128xf32, #tpu.memory_space<vmem>>, %arg6: memref<8x128xi32, #tpu.memory_space<vmem>>) attributes {dimension_semantics = [#tpu.dimension_semantics<parallel>], iteration_bounds = array<i64: 1>, scalar_prefetch = 0 : i64, scratch_operands = 0 : i64, tpu.core_type = #tpu.core_type<tc>, window_params = [{transform_indices = @transform_0, window_bounds = array<i64: 8, 32>}, {pipeline_mode = #tpu.pipeline_mode<synchronous>, transform_indices = @transform_1, window_bounds = array<i64: 32, 128>}, {pipeline_mode = #tpu.pipeline_mode<synchronous>, transform_indices = @transform_2, window_bounds = array<i64: 1, 128>}, {transform_indices = @transform_3, window_bounds = array<i64: 8, 128>}, {transform_indices = @transform_4, window_bounds = array<i64: 8, 128>}, {transform_indices = @transform_5, window_bounds = array<i64: 8, 128>}]} {
    %c0 = arith.constant 0 : index
    %c0_0 = arith.constant 0 : index
    %0 = vector.load %arg1[%c0, %c0_0] : memref<8x32xf32, #tpu.memory_space<vmem>>, vector<8x32xf32>
    %c0_1 = arith.constant 0 : index
    %c0_2 = arith.constant 0 : index
    %1 = vector.load %arg2[%c0_1, %c0_2] : memref<32x128xf32, #tpu.memory_space<vmem>>, vector<32x128xf32>
    %c0_3 = arith.constant 0 : index
    %c0_4 = arith.constant 0 : index
    %2 = vector.load %arg3[%c0_3, %c0_4] : memref<1x128xf32, #tpu.memory_space<vmem>>, vector<1x128xf32>
    %cst = arith.constant dense<0.000000e+00> : vector<8x128xf32>
    %3 = tpu.matmul %0, %1, %cst {dimension_numbers = #tpu.dot_dimension_numbers<[1], [0], [0], [1], [0, 0, 1, 1], [], []>} : vector<8x32xf32>, vector<32x128xf32>, vector<8x128xf32> -> vector<8x128xf32>
    %4 = vector.broadcast %2 : vector<1x128xf32> to vector<8x128xf32>
    %5 = arith.addf %3, %4 : vector<8x128xf32>
    %c0_5 = arith.constant 0 : index
    %c0_6 = arith.constant 0 : index
    %6 = vector.load %arg4[%c0_5, %c0_6] : memref<8x128xf32, #tpu.memory_space<vmem>>, vector<8x128xf32>
    tpu.vector_store %arg4[%c0_5, %c0_6], %5 {strides = array<i32>} : memref<8x128xf32, #tpu.memory_space<vmem>>, vector<8x128xf32>,
    %cst_7 = arith.constant dense<0xFF800000> : vector<8xf32>
    %7 = vector.multi_reduction <maximumf>, %5, %cst_7 [1] : vector<8x128xf32> to vector<8xf32>
    %8 = vector.shape_cast %7 : vector<8xf32> to vector<8x1xf32>
    %9 = vector.broadcast %8 : vector<8x1xf32> to vector<8x128xf32>
    %10 = arith.subf %5, %9 : vector<8x128xf32>
    %11 = math.exp %10 : vector<8x128xf32>
    %cst_8 = arith.constant dense<0.000000e+00> : vector<8xf32>
    %12 = vector.multi_reduction <add>, %11, %cst_8 [1] : vector<8x128xf32> to vector<8xf32>
    %13 = vector.shape_cast %12 : vector<8xf32> to vector<8x1xf32>
    %14 = tpu.reciprocal %13 {approx = true} : vector<8x1xf32> -> vector<8x1xf32>
    %15 = vector.broadcast %14 : vector<8x1xf32> to vector<8x128xf32>
    %16 = arith.mulf %11, %15 : vector<8x128xf32>
    %c0_9 = arith.constant 0 : index
    %c0_10 = arith.constant 0 : index
    %17 = vector.load %arg5[%c0_9, %c0_10] : memref<8x128xf32, #tpu.memory_space<vmem>>, vector<8x128xf32>
    tpu.vector_store %arg5[%c0_9, %c0_10], %16 {strides = array<i32>} : memref<8x128xf32, #tpu.memory_space<vmem>>, vector<8x128xf32>,
    %18 = tpu.iota {dimensions = array<i32: 1>} : vector<8x128xi32>
    %19 = vector.broadcast %8 : vector<8x1xf32> to vector<8x128xf32>
    %20 = arith.cmpf oeq, %5, %19 : vector<8x128xf32>
    %c2147483647_i32 = arith.constant 2147483647 : i32
    %21 = vector.broadcast %c2147483647_i32 : i32 to vector<8x128xi32>
    %22 = arith.select %20, %18, %21 : vector<8x128xi1>, vector<8x128xi32>
    %cst_11 = arith.constant dense<2147483647> : vector<8xi32>
    %23 = vector.multi_reduction <minsi>, %22, %cst_11 [1] : vector<8x128xi32> to vector<8xi32>
    %24 = vector.shape_cast %23 : vector<8xi32> to vector<8x1xi32>
    %25 = vector.shape_cast %24 : vector<8x1xi32> to vector<8x1xi32>
    %26 = vector.broadcast %25 : vector<8x1xi32> to vector<8x128xi32>
    %c0_12 = arith.constant 0 : index
    %c0_13 = arith.constant 0 : index
    %27 = vector.load %arg6[%c0_12, %c0_13] : memref<8x128xi32, #tpu.memory_space<vmem>>, vector<8x128xi32>
    tpu.vector_store %arg6[%c0_12, %c0_13], %26 {strides = array<i32>} : memref<8x128xi32, #tpu.memory_space<vmem>>, vector<8x128xi32>,
    return
  }
  func.func @transform_0(%arg0: i32) -> (i32, i32) {
    %c0_i32 = arith.constant 0 : i32
    %c0_i32_0 = arith.constant 0 : i32
    return %arg0, %c0_i32 : i32, i32
  }
  func.func @transform_1(%arg0: i32) -> (i32, i32) {
    %c0_i32 = arith.constant 0 : i32
    %c0_i32_0 = arith.constant 0 : i32
    %c0_i32_1 = arith.constant 0 : i32
    return %c0_i32, %c0_i32_0 : i32, i32
  }
  func.func @transform_2(%arg0: i32) -> (i32, i32) {
    %c0_i32 = arith.constant 0 : i32
    %c0_i32_0 = arith.constant 0 : i32
    %c0_i32_1 = arith.constant 0 : i32
    return %c0_i32, %c0_i32_0 : i32, i32
  }
  func.func @transform_3(%arg0: i32) -> (i32, i32) {
    %c0_i32 = arith.constant 0 : i32
    %c0_i32_0 = arith.constant 0 : i32
    return %arg0, %c0_i32 : i32, i32
  }
  func.func @transform_4(%arg0: i32) -> (i32, i32) {
    %c0_i32 = arith.constant 0 : i32
    %c0_i32_0 = arith.constant 0 : i32
    return %arg0, %c0_i32 : i32, i32
  }
  func.func @transform_5(%arg0: i32) -> (i32, i32) {
    %c0_i32 = arith.constant 0 : i32
    %c0_i32_0 = arith.constant 0 : i32
    return %arg0, %c0_i32 : i32, i32
  }
}

</mosaic_0001>

<llo_original>
// kernel: tpu_custom_call.1
$region0: #{tpu_custom_call.1}
  #allocation0 [shape = 'u32[]', space=smem, size = 0x4, offset = 0x4, fixed_abs, tag = 'smem constant byte address 0x4 - core index']
  #allocation1 [shape = 'u32[144,128]{1,0:T(1,128)}', space=vmem, size = 0x12000, scoped, tag = 'internal scratch']
  %s0 = inlined_call_operand.hbm [shape: f32[8,32], index: 0, kind: input, shape index: {}]
  %s1 = inlined_call_operand.hbm [shape: f32[32,128], index: 1, kind: input, shape index: {}]
  %s2 = inlined_call_operand.vmem [shape: f32[1,128], index: 2, kind: input, shape index: {}]
  %s3 = inlined_call_operand.hbm [shape: f32[8,128], index: 3, kind: output, shape index: {0}]
  %s4 = inlined_call_operand.hbm [shape: f32[8,128], index: 4, kind: output, shape index: {1}]
  %s5 = inlined_call_operand.hbm [shape: s32[8,128], index: 5, kind: output, shape index: {2}]
  %6 = xla_tuple %s3, %s4, %s5
  %s7 = sld [smem:[#allocation0]]
  $region46: #{tpu_custom_call.1} parent=0
    _
  %s9 = ssub.s32 1, %s7
  %s10 = scalar_select 0, %s9, %s7
  $region1: #{tpu_custom_call.1} parent=0
    #allocation2 [shape = 'u8[4096]{0}', space=vmem, size = 0x1000, scoped, tag = 'input window, operand 0, single buffered']
    #allocation3 [shape = 's32[1]{0}', space=sflag, size = 0x4, scoped, tag = 'scoped memory for tpu_custom_call.1']
    #allocation4 [shape = 's32[1]{0}', space=sflag, size = 0x4, scoped, tag = 'scoped memory for tpu_custom_call.1']
    #allocation5 [shape = 'u8[16384]{0}', space=vmem, size = 0x4000, scoped, tag = 'input window, operand 1, single buffered']
    #allocation6 [shape = 's32[1]{0}', space=sflag, size = 0x4, scoped, tag = 'scoped memory for tpu_custom_call.1']
    #allocation7 [shape = 'u8[4096]{0}', space=vmem, size = 0x1000, scoped, tag = 'output window, operand 0, single buffered']
    #allocation8 [shape = 'u8[4096]{0}', space=vmem, size = 0x1000, scoped, tag = 'output window, operand 1, single buffered']
    #allocation9 [shape = 's32[1]{0}', space=sflag, size = 0x4, scoped, tag = 'scoped memory for tpu_custom_call.1']
    #allocation10 [shape = 'u8[4096]{0}', space=vmem, size = 0x1000, scoped, tag = 'output window, operand 2, single buffered']
    %11 = vsyncpa [#allocation3], 0
    %12 = vsyncpa [#allocation6], 0
    %13 = vsyncpa [#allocation4], 0
    %14 = vsyncpa [#allocation9], 0
    // Predicated region
    $region2: #{tpu_custom_call.1} parent=1 // pred_check
      _
    $region3: #{tpu_custom_call.1} parent=1 // pred_check_branch
      %16 = sbr.rel (0) target = $region5
    $region4: #{tpu_custom_call.1} parent=1 // pred_region
      %s18 = ssub.s32 128, 128
      %19 = vsyncadd [#allocation3], %s18
      %s21 = sshll.u32 [#allocation2], 4
      %s22 = int_to_ptr.vmem [resolvable:$true] %s21
      %24 = dma.hbm_to_vmem [thread:$0]  %s0, 128, %s22, [#allocation3]
    $region5: #{tpu_custom_call.1} parent=1 // pred_fallthru
      _
    // Predicated region
    $region6: #{tpu_custom_call.1} parent=1 // pred_check
      _
    $region7: #{tpu_custom_call.1} parent=1 // pred_check_branch
      %26 = sbr.rel (0) target = $region9
    $region8: #{tpu_custom_call.1} parent=1 // pred_region
      %s28 = ssub.s32 512, 512
      %29 = vsyncadd [#allocation6], %s28
      %s30 = sshll.u32 [#allocation5], 4
      %s31 = int_to_ptr.vmem [resolvable:$true] %s30
      %36 = dma.hbm_to_vmem [thread:$0]  %s1, 512, %s31, [#allocation6], 128, 128, 8
    $region9: #{tpu_custom_call.1} parent=1 // pred_fallthru
      _
    // Predicated region
    $region10: #{tpu_custom_call.1} parent=1 // pred_check
      _
    $region11: #{tpu_custom_call.1} parent=1 // pred_check_branch
      %38 = sbr.rel (0) target = $region13
    $region12: #{tpu_custom_call.1} parent=1 // pred_region
      _
    $region13: #{tpu_custom_call.1} parent=1 // pred_fallthru
      _
    // Predicated region
    $region14: #{tpu_custom_call.1} parent=1 // pred_check
      _
    $region15: #{tpu_custom_call.1} parent=1 // pred_check_branch
      %40 = sbr.rel (0) target = $region17
    $region16: #{tpu_custom_call.1} parent=1 // pred_region
      %41 = dma.done [#allocation3], 128
    $region17: #{tpu_custom_call.1} parent=1 // pred_fallthru
      _
    // Predicated region
    $region18: #{tpu_custom_call.1} parent=1 // pred_check
      _
    $region19: #{tpu_custom_call.1} parent=1 // pred_check_branch
      %43 = sbr.rel (0) target = $region21
    $region20: #{tpu_custom_call.1} parent=1 // pred_region
      %44 = dma.done [#allocation6], 512
    $region21: #{tpu_custom_call.1} parent=1 // pred_fallthru
      _
    %v45 = vld [vmem:[#allocation2] sm:$0xff]
    %v46 = vld [vmem:[#allocation5] sm:$0xff]
    %v47 = vld [vmem:[#allocation5 + $0x8] sm:$0xff]
    %v48 = vld [vmem:[#allocation5 + $0x10] sm:$0xff]
    %v49 = vld [vmem:[#allocation5 + $0x18] sm:$0xff]
    %v50 = vld [vmem:[%s2] sm:$0x1]
    %v52 = vlaneseq
    %v53 = vshrl.u32 %v52, 7
    %v54 = vsub.s32 0, %v53
    %v55 = vrot.slane %v50, %v54
    %vm57 = vcmask 261120
    %v59 = vsel %vm57, %v45, 0
    %61 = vmatprep.subr.mxu0 0.0
    %62 = vmatpush1.msra.mxu0 %v46
    %63 = vmatprep.subr.mxu0 0.0
    %64 = vmatpush1.msra.mxu0 %v47
    %65 = vmatprep.subr.mxu0 0.0
    %66 = vmatpush1.msra.mxu0 %v48
    %67 = vmatprep.subr.mxu0 0.0
    %68 = vmatpush1.msra.mxu0 %v49
    %69 = vmatprep.subr.mxu0 0.0
    %70 = vmatpush1.msra.mxu0 0.0
    %71 = vmatprep.subr.mxu0 0.0
    %72 = vmatpush1.msra.mxu0 0.0
    %73 = vmatprep.subr.mxu0 0.0
    %74 = vmatpush1.msra.mxu0 0.0
    %75 = vmatprep.subr.mxu0 0.0
    %76 = vmatpush1.msra.mxu0 0.0
    %77 = vmatprep.subr.mxu0 0.0
    %78 = vmatpush1.msra.mxu0 0.0
    %79 = vmatprep.subr.mxu0 0.0
    %80 = vmatpush1.msra.mxu0 0.0
    %81 = vmatprep.subr.mxu0 0.0
    %82 = vmatpush1.msra.mxu0 0.0
    %83 = vmatprep.subr.mxu0 0.0
    %84 = vmatpush1.msra.mxu0 0.0
    %85 = vmatprep.subr.mxu0 0.0
    %86 = vmatpush1.msra.mxu0 0.0
    %87 = vmatprep.subr.mxu0 0.0
    %88 = vmatpush1.msra.mxu0 0.0
    %89 = vmatprep.subr.mxu0 0.0
    %90 = vmatpush1.msra.mxu0 0.0
    %91 = vmatprep.subr.mxu0 0.0
    %92 = vmatpush1.msra.mxu0 0.0
    %93 = vmatprep.subr.mxu0 0.0
    %94 = vmatpush1.msra.mxu0 0.0
    %95 = vmatprep.subr.mxu0 0.0
    %96 = vmatpush1.msra.mxu0 0.0
    %97 = vmatprep.subr.mxu0 0.0
    %98 = vmatpush1.msra.mxu0 0.0
    %99 = vmatprep.subr.mxu0 0.0
    %100 = vmatpush1.msra.mxu0 0.0
    %101 = vmatprep.subr.mxu0 0.0
    %102 = vmatpush1.msra.mxu0 0.0
    %103 = vmatprep.subr.mxu0 0.0
    %104 = vmatpush1.msra.mxu0 0.0
    %105 = vmatprep.subr.mxu0 0.0
    %106 = vmatpush1.msra.mxu0 0.0
    %107 = vmatprep.subr.mxu0 0.0
    %108 = vmatpush1.msra.mxu0 0.0
    %109 = vmatprep.subr.mxu0 0.0
    %110 = vmatpush1.msra.mxu0 0.0
    %111 = vmatprep.subr.mxu0 0.0
    %112 = vmatpush1.msra.mxu0 0.0
    %113 = vmatprep.subr.mxu0 0.0
    %114 = vmatpush1.msra.mxu0 0.0
    %115 = vmatprep.subr.mxu0 0.0
    %116 = vmatpush1.msra.mxu0 0.0
    %117 = vmatprep.subr.mxu0 0.0
    %118 = vmatpush1.msra.mxu0 0.0
    %119 = vmatprep.subr.mxu0 0.0
    %120 = vmatpush1.msra.mxu0 0.0
    %121 = vmatprep.subr.mxu0 0.0
    %122 = vmatpush1.msra.mxu0 0.0
    %123 = vmatprep.subr.mxu0 0.0
    %124 = vmatpush1.msra.mxu0 0.0
    %125 = vmatprep.mubr.f32.mxu0 0.0
    %126 = vmatmul.mubr.f32.gmra.mrb[0].mxu0 %v59
    %v127 = vpop.f32.mrb[0].mxu0
    %v128 = vadd.f32 %v55, %v127
    %v129 = vpop.f32.mrb[0].mxu0
    %130 = vdwg.mxu0
    %131 = vst [vmem:[#allocation7] sm:$0xff] %v128
    %132 = vmax.xlane.f32.xlu0 %v128
    %v133 = vpop.xlane.xlu0 %132
    %v134 = vsub.f32 %v128, %v133
    %v135 = vmul.f32 %v134, 1.442695
    %v136 = vpow.pop %v135
    %137 = vadd.xlane.f32.xlu0 %v136
    %v138 = vpop.xlane.xlu0 %137
    %v139 = vrcp.pop %v138
    %v140 = vmul.f32 %v136, %v139
    %141 = vst [vmem:[#allocation8] sm:$0xff] %v140
    %v142 = vlaneseq
    %v143 = vand.u32 %v142, 127
    %vm144 = vcmp.eq.f32.partialorder %v128, %v133
    %v145 = vsel %vm144, %v143, 2147483647
    %v146 = vand.u32 %v145, 65535
    %v147 = vshra.s32 %v145, 16
    %v148 = vcvt.s32.f32 %v146
    %v149 = vcvt.s32.f32 %v147
    %150 = vmin.xlane.f32.xlu0 %v149
    %v151 = vpop.xlane.xlu0 %150
    %vm152 = vcmp.eq.f32.partialorder %v149, %v151
    %v153 = vsel %vm152, %v148, inf
    %154 = vmin.xlane.f32.xlu0 %v153
    %v155 = vpop.xlane.xlu0 %154
    %v156 = vcvt.f32.s32 %v155
    %v157 = vcvt.f32.s32 %v151
    %v158 = vshll.u32 %v157, 16
    %v159 = vadd.s32 %v158, %v156
    %160 = vst [vmem:[#allocation10] sm:$0xff] %v159
    // Predicated region
    $region22: #{tpu_custom_call.1} parent=1 // pred_check
      _
    $region23: #{tpu_custom_call.1} parent=1 // pred_check_branch
      %162 = sbr.rel (0) target = $region25
    $region24: #{tpu_custom_call.1} parent=1 // pred_region
      %s164 = ssub.s32 128, 128
      %165 = vsyncadd [#allocation4], %s164
      %s167 = sshll.u32 [#allocation7], 4
      %s168 = int_to_ptr.vmem [resolvable:$true] %s167
      %170 = dma.vmem_to_hbm [thread:$0]  %s168, 128, %s3, [#allocation4]
    $region25: #{tpu_custom_call.1} parent=1 // pred_fallthru
      _
    // Predicated region
    $region26: #{tpu_custom_call.1} parent=1 // pred_check
      _
    $region27: #{tpu_custom_call.1} parent=1 // pred_check_branch
      %172 = sbr.rel (0) target = $region29
    $region28: #{tpu_custom_call.1} parent=1 // pred_region
      %s174 = ssub.s32 128, 128
      %175 = vsyncadd [#allocation9], %s174
      %s177 = sshll.u32 [#allocation8], 4
      %s178 = int_to_ptr.vmem [resolvable:$true] %s177
      %180 = dma.vmem_to_hbm [thread:$0]  %s178, 128, %s4, [#allocation9]
    $region29: #{tpu_custom_call.1} parent=1 // pred_fallthru
      _
    // Predicated region
    $region30: #{tpu_custom_call.1} parent=1 // pred_check
      _
    $region31: #{tpu_custom_call.1} parent=1 // pred_check_branch
      %182 = sbr.rel (0) target = $region33
    $region32: #{tpu_custom_call.1} parent=1 // pred_region
      %s184 = ssub.s32 128, 128
      %185 = vsyncadd [#allocation9], %s184
      %s187 = sshll.u32 [#allocation10], 4
      %s188 = int_to_ptr.vmem [resolvable:$true] %s187
      %190 = dma.vmem_to_hbm [thread:$0]  %s188, 128, %s5, [#allocation9]
    $region33: #{tpu_custom_call.1} parent=1 // pred_fallthru
      _
    // Predicated region
    $region34: #{tpu_custom_call.1} parent=1 // pred_check
      _
    $region35: #{tpu_custom_call.1} parent=1 // pred_check_branch
      %192 = sbr.rel (0) target = $region37
    $region36: #{tpu_custom_call.1} parent=1 // pred_region
      %193 = dma.done [#allocation4], 128
    $region37: #{tpu_custom_call.1} parent=1 // pred_fallthru
      _
    // Predicated region
    $region38: #{tpu_custom_call.1} parent=1 // pred_check
      _
    $region39: #{tpu_custom_call.1} parent=1 // pred_check_branch
      %195 = sbr.rel (0) target = $region41
    $region40: #{tpu_custom_call.1} parent=1 // pred_region
      %196 = dma.done [#allocation9], 128
    $region41: #{tpu_custom_call.1} parent=1 // pred_fallthru
      _
    // Predicated region
    $region42: #{tpu_custom_call.1} parent=1 // pred_check
      _
    $region43: #{tpu_custom_call.1} parent=1 // pred_check_branch
      %198 = sbr.rel (0) target = $region45
    $region44: #{tpu_custom_call.1} parent=1 // pred_region
      %199 = dma.done [#allocation9], 128
    $region45: #{tpu_custom_call.1} parent=1 // pred_fallthru
      _
    %200 = vsyncpa [#allocation3], 1
    %201 = vsyncpa [#allocation6], 1
    %202 = vsyncpa [#allocation4], 1
    %203 = vsyncpa [#allocation9], 1

</llo_original>
